<compile_context>
chip_gen: v5e
topology: v5e:2x2
jax: 0.10.0
libtpu: 0.0.40
codegen_flags: <defaults>
</compile_context>

<pallas_src>
import math
import functools

import jax
import jax.numpy as jnp
from jax.experimental import pallas as pl
from jax.experimental.pallas import tpu as pltpu

LANES = 128
SUBLANES = 8
CHUNK = SUBLANES * LANES  # 1024 elements: keeps every kernel row-block sublane aligned

_PI = math.pi
_PI_2 = math.pi / 2.0
_PI_4 = math.pi / 4.0
_TAN_PI_8 = 0.41421356237309503


def _atan2_plus_pi(u, v):
    """Hand-rolled atan2(u, v) + pi in f32.

    Octant reduction gives a single division, done as an approximate EUP
    reciprocal + 2 Newton-Raphson steps, followed by a short minimax (cephes)
    polynomial valid on |t| <= tan(pi/8), then quadrant selects.
    NOTE: -0.0 inputs follow the x<0 / x>=0 branch of ordinary compares (the
    IEEE signed-zero corner of atan2 differs by 2*pi there); measure-zero for
    real data and irrelevant for this module.
    """
    au = jnp.abs(u)
    av = jnp.abs(v)
    a = jnp.minimum(au, av)
    b = jnp.maximum(au, av)

    # atan(a/b) = pi/4 + atan((a-b)/(a+b)) when a/b > tan(pi/8); pick num/den
    # before the single division so only one reciprocal is needed.
    big = a > jnp.float32(_TAN_PI_8) * b
    num = jnp.where(big, a - b, a)
    den = jnp.where(big, a + b, b)
    den = jnp.where(den == jnp.float32(0.0), jnp.float32(1.0), den)  # atan2(0,0) -> 0

    r = pl.reciprocal(den, approx=True)              # EUP slot, nearly free
    r = r * (jnp.float32(2.0) - den * r)             # Newton step 1 (VALU)
    r = r * (jnp.float32(2.0) - den * r)             # Newton step 2 (VALU)
    t = num * r                                      # |t| <= tan(pi/8)

    z = t * t
    poly = jnp.float32(8.05374449538e-2)
    poly = poly * z - jnp.float32(1.38776856032e-1)
    poly = poly * z + jnp.float32(1.99777106478e-1)
    poly = poly * z - jnp.float32(3.33329491539e-1)
    at = poly * z * t + t
    at = at + jnp.where(big, jnp.float32(_PI_4), jnp.float32(0.0))

    # Undo the |u|<->|v| swap, then restore quadrant and sign of u.
    at = jnp.where(au > av, jnp.float32(_PI_2) - at, at)
    at = jnp.where(v < jnp.float32(0.0), jnp.float32(_PI) - at, at)
    at = jnp.where(u < jnp.float32(0.0), -at, at)
    return at + jnp.float32(_PI)


def _v2m_kernel(u_ref, v_ref, p_ref, ang_ref, *, tresh):
    # Upcast inside the kernel (no separate XLA cast pass over HBM).
    u = u_ref[...].astype(jnp.float32)
    v = v_ref[...].astype(jnp.float32)

    p = jnp.sqrt(u * u + v * v)
    angle = _atan2_plus_pi(u, v)

    # clamp(threshold(p, tresh, 0), 0, 1) with p >= 0:
    #   == min(p, 1) where p > tresh, else 0
    gate = jnp.where(
        p > jnp.float32(tresh),
        jnp.minimum(p, jnp.float32(1.0)),
        jnp.float32(0.0),
    )

    p_ref[...] = p.astype(p_ref.dtype)
    ang_ref[...] = (angle * gate).astype(ang_ref.dtype)


def _max_row_tile_for_device():
    """Generation-aware tile cap (rows of 128 lanes)."""
    try:
        kind = jax.devices()[0].device_kind.lower()
    except Exception:  # pragma: no cover
        kind = ""
    # v6e / v7x / v4 / v5p: 4096-row f32 tiles -> 16 MiB double-buffered across
    # 4 refs; fits the 32 MiB default scoped VMEM with headroom (v7x VMEM is
    # 64 MiB per TC, so do not scale past this).
    if any(tag in kind for tag in ("v6", "v7", "v5p", "v4")):
        return 4096
    # v5e (and unknown/older parts): 2048-row tiles (8 MiB double-buffered)
    # stay inside the 16 MiB default scoped VMEM.
    return 2048


def _choose_row_tile(rows, max_tile):
    """Pick a sublane-aligned row tile aiming for >= ~4 grid steps.

    Guarantees multiple grid iterations whenever rows > 8 so both v7x
    TensorCores get work under dimension_semantics=("parallel",), while
    keeping tiles large (per-grid-step overhead ~0.35 us).
    """
    target = -(-rows // 4)                              # cdiv(rows, 4)
    target = -(-target // SUBLANES) * SUBLANES          # round up to sublanes
    return int(max(SUBLANES, min(max_tile, target)))


def _tail_compute(u_t, v_t, tresh):
    """Plain-JAX path for the (< 1024 element) unaligned tail / tiny inputs."""
    uf = u_t.astype(jnp.float32)
    vf = v_t.astype(jnp.float32)
    p = jnp.sqrt(uf * uf + vf * vf)
    ang = jnp.arctan2(uf, vf) + jnp.float32(_PI)
    gate = jnp.where(p > jnp.float32(tresh), jnp.minimum(p, 1.0), 0.0)
    return p.astype(u_t.dtype), (ang * gate).astype(u_t.dtype)


def vector_to_magnitude(u, v, tresh):
    """Pallas implementation of VectorToMagnitude.forward((u, v))."""
    assert u.shape == v.shape
    orig_shape = u.shape
    dtype = u.dtype
    n = u.size

    uf = u.reshape(-1)
    vf = v.reshape(-1)

    # Kernel handles the 1024-aligned prefix; tail (< 1024 elems) in plain JAX.
    # This avoids the whole-array pad + post-slice copies of the old ragged path.
    n_main = (n // CHUNK) * CHUNK

    if n_main == 0:
        p_t, a_t = _tail_compute(uf, vf, tresh)
        return p_t.reshape(orig_shape), a_t.reshape(orig_shape)

    rows = n_main // LANES  # always a multiple of 8
    u2 = uf[:n_main].reshape(rows, LANES)
    v2 = vf[:n_main].reshape(rows, LANES)

    max_tile = _max_row_tile_for_device()
    row_tile = _choose_row_tile(rows, max_tile)
    grid = (pl.cdiv(rows, row_tile),)
    blk = pl.BlockSpec((row_tile, LANES), lambda i: (i, 0))

    itemsize = u.dtype.itemsize
    # 2 inputs + 2 outputs, double-buffered, plus headroom for compiler scratch.
    footprint = 4 * 2 * row_tile * LANES * itemsize
    vmem_limit = int(min(64 << 20, footprint + (8 << 20)))

    cost = pl.CostEstimate(
        flops=int(40 * n_main),
        transcendentals=int(3 * n_main),   # sqrt + reciprocal per element
        bytes_accessed=int(4 * n_main * itemsize),
    )

    # TODO(synk): tresh is baked in as a compile-time constant (matches the
    # PyTorch module where it is fixed at __init__); route it through SMEM
    # scalar prefetch if it must vary at runtime without recompiling.
    p2, a2 = pl.pallas_call(
        functools.partial(_v2m_kernel, tresh=float(tresh)),
        out_shape=(
            jax.ShapeDtypeStruct((rows, LANES), dtype),
            jax.ShapeDtypeStruct((rows, LANES), dtype),
        ),
        grid_spec=pltpu.PrefetchScalarGridSpec(
            num_scalar_prefetch=0,
            grid=grid,
            in_specs=[blk, blk],   # NOTE: sweep pipeline_mode=pl.Buffered(3) if a
            out_specs=[blk, blk],  # profile ever shows exposed DMA at step edges.
        ),
        compiler_params=pltpu.CompilerParams(
            dimension_semantics=("parallel",),
            vmem_limit_bytes=vmem_limit,
        ),
        cost_estimate=cost,
    )(u2, v2)

    if n_main == n:
        return p2.reshape(orig_shape), a2.reshape(orig_shape)

    p_t, a_t = _tail_compute(uf[n_main:], vf[n_main:], tresh)
    p = jnp.concatenate([p2.reshape(-1), p_t]).reshape(orig_shape)
    a = jnp.concatenate([a2.reshape(-1), a_t]).reshape(orig_shape)
    return p, a


def _reference(u, v, tresh):
    uf = u.astype(jnp.float32)
    vf = v.astype(jnp.float32)
    p = jnp.sqrt(uf * uf + vf * vf)
    angle = jnp.arctan2(uf, vf) + math.pi
    gate = jnp.clip(jnp.where(p > tresh, p, 0.0), 0.0, 1.0)
    return p.astype(u.dtype), (angle * gate).astype(u.dtype)


if __name__ == "__main__":
    tresh = 0.5

    # Main case: NCHW, element count divisible by 1024 (fully aligned path,
    # multi-step grid so both v7x TCs get work).
    shape = (2, 4, 16, 16)
    ku, kv = jax.random.split(jax.random.PRNGKey(0))
    u = jax.random.normal(ku, shape, dtype=jnp.float32)
    v = jax.random.normal(kv, shape, dtype=jnp.float32)

    p, ang = vector_to_magnitude(u, v, tresh)
    jax.block_until_ready((p, ang))

    p_ref, ang_ref = _reference(u, v, tresh)
    assert jnp.allclose(p, p_ref, atol=1e-5, rtol=1e-5)
    assert jnp.allclose(ang, ang_ref, atol=1e-5, rtol=1e-5)

    # Ragged case: 4224 elements -> 4096-element prefix through the kernel
    # (grid of several blocks) + 128-element tail in plain JAX.
    shape2 = (2, 4, 33, 16)
    k2u, k2v = jax.random.split(jax.random.PRNGKey(1))
    u2 = jax.random.normal(k2u, shape2, dtype=jnp.float32)
    v2 = jax.random.normal(k2v, shape2, dtype=jnp.float32)
    p2, ang2 = vector_to_magnitude(u2, v2, tresh)
    jax.block_until_ready((p2, ang2))
    p2_ref, ang2_ref = _reference(u2, v2, tresh)
    assert jnp.allclose(p2, p2_ref, atol=1e-5, rtol=1e-5)
    assert jnp.allclose(ang2, ang2_ref, atol=1e-5, rtol=1e-5)

    print("KERNEL_OK")
</pallas_src>

<mosaic_0001>
module attributes {stable_mosaic.version = 11 : i64} {
  func.func @_v2m_kernel(%arg0: i32, %arg1: memref<8x128xf32, #tpu.memory_space<vmem>>, %arg2: memref<8x128xf32, #tpu.memory_space<vmem>>, %arg3: memref<8x128xf32, #tpu.memory_space<vmem>>, %arg4: memref<8x128xf32, #tpu.memory_space<vmem>>) attributes {dimension_semantics = [#tpu.dimension_semantics<parallel>], iteration_bounds = array<i64: 2>, scalar_prefetch = 0 : i64, scratch_operands = 0 : i64, tpu.core_type = #tpu.core_type<tc>, window_params = [{transform_indices = @transform_0, window_bounds = array<i64: 8, 128>}, {transform_indices = @transform_1, window_bounds = array<i64: 8, 128>}, {transform_indices = @transform_2, window_bounds = array<i64: 8, 128>}, {transform_indices = @transform_3, window_bounds = array<i64: 8, 128>}]} {
    %c0 = arith.constant 0 : index
    %c0_0 = arith.constant 0 : index
    %0 = vector.load %arg1[%c0, %c0_0] : memref<8x128xf32, #tpu.memory_space<vmem>>, vector<8x128xf32>
    %c0_1 = arith.constant 0 : index
    %c0_2 = arith.constant 0 : index
    %1 = vector.load %arg2[%c0_1, %c0_2] : memref<8x128xf32, #tpu.memory_space<vmem>>, vector<8x128xf32>
    %2 = arith.mulf %0, %0 : vector<8x128xf32>
    %3 = arith.mulf %1, %1 : vector<8x128xf32>
    %4 = arith.addf %2, %3 : vector<8x128xf32>
    %5 = math.sqrt %4 : vector<8x128xf32>
    %6 = math.absf %0 : vector<8x128xf32>
    %7 = math.absf %1 : vector<8x128xf32>
    %8 = arith.minimumf %6, %7 : vector<8x128xf32>
    %9 = arith.maximumf %6, %7 : vector<8x128xf32>
    %cst = arith.constant 0.414213568 : f32
    %10 = vector.broadcast %cst : f32 to vector<8x128xf32>
    %11 = arith.mulf %10, %9 : vector<8x128xf32>
    %12 = arith.cmpf ogt, %8, %11 : vector<8x128xf32>
    %13 = arith.subf %8, %9 : vector<8x128xf32>
    %14 = arith.select %12, %13, %8 : vector<8x128xi1>, vector<8x128xf32>
    %15 = arith.addf %8, %9 : vector<8x128xf32>
    %16 = arith.select %12, %15, %9 : vector<8x128xi1>, vector<8x128xf32>
    %cst_3 = arith.constant 0.000000e+00 : f32
    %17 = vector.broadcast %cst_3 : f32 to vector<8x128xf32>
    %18 = arith.cmpf oeq, %16, %17 : vector<8x128xf32>
    %cst_4 = arith.constant 1.000000e+00 : f32
    %19 = vector.broadcast %cst_4 : f32 to vector<8x128xf32>
    %20 = arith.select %18, %19, %16 : vector<8x128xi1>, vector<8x128xf32>
    %21 = tpu.reciprocal %20 {approx = true} : vector<8x128xf32> -> vector<8x128xf32>
    %22 = arith.mulf %20, %21 : vector<8x128xf32>
    %cst_5 = arith.constant 2.000000e+00 : f32
    %23 = vector.broadcast %cst_5 : f32 to vector<8x128xf32>
    %24 = arith.subf %23, %22 : vector<8x128xf32>
    %25 = arith.mulf %21, %24 : vector<8x128xf32>
    %26 = arith.mulf %20, %25 : vector<8x128xf32>
    %cst_6 = arith.constant 2.000000e+00 : f32
    %27 = vector.broadcast %cst_6 : f32 to vector<8x128xf32>
    %28 = arith.subf %27, %26 : vector<8x128xf32>
    %29 = arith.mulf %25, %28 : vector<8x128xf32>
    %30 = arith.mulf %14, %29 : vector<8x128xf32>
    %31 = arith.mulf %30, %30 : vector<8x128xf32>
    %cst_7 = arith.constant 0.0805374458 : f32
    %32 = vector.broadcast %cst_7 : f32 to vector<8x128xf32>
    %33 = arith.mulf %32, %31 : vector<8x128xf32>
    %cst_8 = arith.constant 0.138776854 : f32
    %34 = vector.broadcast %cst_8 : f32 to vector<8x128xf32>
    %35 = arith.subf %33, %34 : vector<8x128xf32>
    %36 = arith.mulf %35, %31 : vector<8x128xf32>
    %cst_9 = arith.constant 0.199777111 : f32
    %37 = vector.broadcast %cst_9 : f32 to vector<8x128xf32>
    %38 = arith.addf %36, %37 : vector<8x128xf32>
    %39 = arith.mulf %38, %31 : vector<8x128xf32>
    %cst_10 = arith.constant 0.333329499 : f32
    %40 = vector.broadcast %cst_10 : f32 to vector<8x128xf32>
    %41 = arith.subf %39, %40 : vector<8x128xf32>
    %42 = arith.mulf %41, %31 : vector<8x128xf32>
    %43 = arith.mulf %42, %30 : vector<8x128xf32>
    %44 = arith.addf %43, %30 : vector<8x128xf32>
    %cst_11 = arith.constant 0.785398185 : f32
    %cst_12 = arith.constant 0.000000e+00 : f32
    %45 = vector.broadcast %cst_11 : f32 to vector<8x128xf32>
    %46 = vector.broadcast %cst_12 : f32 to vector<8x128xf32>
    %47 = arith.select %12, %45, %46 : vector<8x128xi1>, vector<8x128xf32>
    %48 = arith.addf %44, %47 : vector<8x128xf32>
    %49 = arith.cmpf ogt, %6, %7 : vector<8x128xf32>
    %cst_13 = arith.constant 1.57079637 : f32
    %50 = vector.broadcast %cst_13 : f32 to vector<8x128xf32>
    %51 = arith.subf %50, %48 : vector<8x128xf32>
    %52 = arith.select %49, %51, %48 : vector<8x128xi1>, vector<8x128xf32>
    %cst_14 = arith.constant 0.000000e+00 : f32
    %53 = vector.broadcast %cst_14 : f32 to vector<8x128xf32>
    %54 = arith.cmpf olt, %1, %53 : vector<8x128xf32>
    %cst_15 = arith.constant 3.14159274 : f32
    %55 = vector.broadcast %cst_15 : f32 to vector<8x128xf32>
    %56 = arith.subf %55, %52 : vector<8x128xf32>
    %57 = arith.select %54, %56, %52 : vector<8x128xi1>, vector<8x128xf32>
    %cst_16 = arith.constant 0.000000e+00 : f32
    %58 = vector.broadcast %cst_16 : f32 to vector<8x128xf32>
    %59 = arith.cmpf olt, %0, %58 : vector<8x128xf32>
    %cst_17 = arith.constant 0.000000e+00 : f32
    %60 = vector.broadcast %cst_17 : f32 to vector<8x128xf32>
    %61 = arith.subf %60, %57 : vector<8x128xf32>
    %62 = arith.select %59, %61, %57 : vector<8x128xi1>, vector<8x128xf32>
    %cst_18 = arith.constant 3.14159274 : f32
    %63 = vector.broadcast %cst_18 : f32 to vector<8x128xf32>
    %64 = arith.addf %62, %63 : vector<8x128xf32>
    %cst_19 = arith.constant 5.000000e-01 : f32
    %65 = vector.broadcast %cst_19 : f32 to vector<8x128xf32>
    %66 = arith.cmpf ogt, %5, %65 : vector<8x128xf32>
    %cst_20 = arith.constant 1.000000e+00 : f32
    %67 = vector.broadcast %cst_20 : f32 to vector<8x128xf32>
    %68 = arith.minimumf %5, %67 : vector<8x128xf32>
    %cst_21 = arith.constant 0.000000e+00 : f32
    %69 = vector.broadcast %cst_21 : f32 to vector<8x128xf32>
    %70 = arith.select %66, %68, %69 : vector<8x128xi1>, vector<8x128xf32>
    %c0_22 = arith.constant 0 : index
    %c0_23 = arith.constant 0 : index
    %71 = vector.load %arg3[%c0_22, %c0_23] : memref<8x128xf32, #tpu.memory_space<vmem>>, vector<8x128xf32>
    tpu.vector_store %arg3[%c0_22, %c0_23], %5 {strides = array<i32>} : memref<8x128xf32, #tpu.memory_space<vmem>>, vector<8x128xf32>,
    %72 = arith.mulf %64, %70 : vector<8x128xf32>
    %c0_24 = arith.constant 0 : index
    %c0_25 = arith.constant 0 : index
    %73 = vector.load %arg4[%c0_24, %c0_25] : memref<8x128xf32, #tpu.memory_space<vmem>>, vector<8x128xf32>
    tpu.vector_store %arg4[%c0_24, %c0_25], %72 {strides = array<i32>} : memref<8x128xf32, #tpu.memory_space<vmem>>, vector<8x128xf32>,
    return
  }
  func.func @transform_0(%arg0: i32) -> (i32, i32) {
    %c0_i32 = arith.constant 0 : i32
    %c0_i32_0 = arith.constant 0 : i32
    return %arg0, %c0_i32 : i32, i32
  }
  func.func @transform_1(%arg0: i32) -> (i32, i32) {
    %c0_i32 = arith.constant 0 : i32
    %c0_i32_0 = arith.constant 0 : i32
    return %arg0, %c0_i32 : i32, i32
  }
  func.func @transform_2(%arg0: i32) -> (i32, i32) {
    %c0_i32 = arith.constant 0 : i32
    %c0_i32_0 = arith.constant 0 : i32
    return %arg0, %c0_i32 : i32, i32
  }
  func.func @transform_3(%arg0: i32) -> (i32, i32) {
    %c0_i32 = arith.constant 0 : i32
    %c0_i32_0 = arith.constant 0 : i32
    return %arg0, %c0_i32 : i32, i32
  }
}

</mosaic_0001>

<llo_original>
// kernel: tpu_custom_call.1
$region0: #{tpu_custom_call.1}
  #allocation0 [shape = 'u32[]', space=smem, size = 0x4, offset = 0x4, fixed_abs, tag = 'smem constant byte address 0x4 - core index']
  #allocation1 [shape = 'u32[72,128]{1,0:T(1,128)}', space=vmem, size = 0x9000, scoped, tag = 'internal scratch']
  %s0 = inlined_call_operand.hbm [shape: f32[16,128], index: 0, kind: input, shape index: {}]
  %s1 = inlined_call_operand.hbm [shape: f32[16,128], index: 1, kind: input, shape index: {}]
  %s2 = inlined_call_operand.hbm [shape: f32[16,128], index: 2, kind: output, shape index: {0}]
  %s3 = inlined_call_operand.hbm [shape: f32[16,128], index: 3, kind: output, shape index: {1}]
  %4 = xla_tuple %s2, %s3
  %s5 = sld [smem:[#allocation0]]
  $region57: #{tpu_custom_call.1} parent=0
    _
  %s7 = ssub.s32 1, %s5
  %s8 = scalar_select 0, %s7, %s5
  $region1: #{tpu_custom_call.1} parent=0
    #allocation2 [shape = 'u8[8192]{0}', space=vmem, size = 0x2000, scoped, tag = 'input window, operand 0']
    #allocation3 [shape = 's32[2]{0}', space=sflag, size = 0x8, scoped, tag = 'scoped memory for tpu_custom_call.1']
    #allocation4 [shape = 's32[2]{0}', space=sflag, size = 0x8, scoped, tag = 'scoped memory for tpu_custom_call.1']
    #allocation5 [shape = 'u8[8192]{0}', space=vmem, size = 0x2000, scoped, tag = 'input window, operand 1']
    #allocation6 [shape = 's32[2]{0}', space=sflag, size = 0x8, scoped, tag = 'scoped memory for tpu_custom_call.1']
    #allocation7 [shape = 'u8[8192]{0}', space=vmem, size = 0x2000, scoped, tag = 'output window, operand 0']
    #allocation8 [shape = 'u8[8192]{0}', space=vmem, size = 0x2000, scoped, tag = 'output window, operand 1']
    #allocation9 [shape = 's32[2]{0}', space=sflag, size = 0x8, scoped, tag = 'scoped memory for tpu_custom_call.1']
    %9 = vsyncpa [#allocation3], 0
    %s10 = scalar_lea.sflag [#allocation3], 1
    %11 = vsyncpa %s10, 0
    %12 = vsyncpa [#allocation6], 0
    %s13 = scalar_lea.sflag [#allocation6], 1
    %14 = vsyncpa %s13, 0
    %15 = vsyncpa [#allocation4], 0
    %s16 = scalar_lea.sflag [#allocation4], 1
    %17 = vsyncpa %s16, 0
    %18 = vsyncpa [#allocation9], 0
    %s19 = scalar_lea.sflag [#allocation9], 1
    %20 = vsyncpa %s19, 0
    loop: start=0, step=1, limit=4
    $region2: #{tpu_custom_call.1} parent=1 // loop_pre_header
      _
    $region3: #{tpu_custom_call.1} parent=1 // loop_header
      %s22 = sphi 0, %s26
      %p23 = scmp.ge.s32.totalorder %s22, 4
      %s32 = sphi 0, %s34
      %s35 = sphi 0, %s32
      %s36 = sphi 0, %s35
      %s52 = sphi 0, %s36
      %s58 = sphi 0, %s60
      %s61 = sphi 0, %s58
      %s62 = sphi 0, %s61
      %s78 = sphi 0, %s62
      %s84 = sphi 0, %s86
      %s87 = sphi 0, %s84
      %s88 = sphi 0, %s87
      %s104 = sphi 0, %s88
      %s110 = sphi 0, %s112
      %s113 = sphi 0, %s110
      %s114 = sphi 0, %s113
      %s130 = sphi 0, %s114
    $region4: #{tpu_custom_call.1} parent=1 // loop_header_branch
      %25 = sbr.rel (%p23) target = $region8
    $region5: #{tpu_custom_call.1} parent=1 // loop_body
      %s27 = ssub.s32 %s22, 1
      %s28 = ssub.s32 %s22, 2
      %s29 = sadd.s32 %s22, 1
      %s30 = ssub.s32 %s22, %s29
      %p31 = scmp.eq.s32.totalorder %s30, 0
      %s33 = sadd.s32 %s32, 1
      %s34 = scalar_select %p31, %s32, %s33
      %p37 = pneg %p31
      %p38 = scmp.eq.s32.totalorder %s22, 1
      %p39 = por %p37, %p38
      %p40 = scmp.ne.s32.totalorder %s32, %s35
      %p41 = scmp.eq.s32.totalorder %s22, 0
      %p42 = por %p40, %p41
      %p43 = scmp.ne.s32.totalorder %s32, %s35
      %p44 = scmp.eq.s32.totalorder %s27, 1
      %p45 = por %p43, %p44
      %p46 = scmp.ne.s32.totalorder %s35, %s36
      %p47 = scmp.eq.s32.totalorder %s27, 0
      %p48 = por %p46, %p47
      %p49 = scmp.ne.s32.totalorder %s35, %s36
      %p50 = scmp.eq.s32.totalorder %s28, 1
      %p51 = por %p49, %p50
      %p53 = scmp.ne.s32.totalorder %s36, %s52
      %p54 = scmp.eq.s32.totalorder %s28, 0
      %p55 = por %p53, %p54
      %s56 = ssub.s32 %s22, %s29
      %p57 = scmp.eq.s32.totalorder %s56, 0
      %s59 = sadd.s32 %s58, 1
      %s60 = scalar_select %p57, %s58, %s59
      %p63 = pneg %p57
      %p64 = scmp.eq.s32.totalorder %s22, 1
      %p65 = por %p63, %p64
      %p66 = scmp.ne.s32.totalorder %s58, %s61
      %p67 = scmp.eq.s32.totalorder %s22, 0
      %p68 = por %p66, %p67
      %p69 = scmp.ne.s32.totalorder %s58, %s61
      %p70 = scmp.eq.s32.totalorder %s27, 1
      %p71 = por %p69, %p70
      %p72 = scmp.ne.s32.totalorder %s61, %s62
      %p73 = scmp.eq.s32.totalorder %s27, 0
      %p74 = por %p72, %p73
      %p75 = scmp.ne.s32.totalorder %s61, %s62
      %p76 = scmp.eq.s32.totalorder %s28, 1
      %p77 = por %p75, %p76
      %p79 = scmp.ne.s32.totalorder %s62, %s78
      %p80 = scmp.eq.s32.totalorder %s28, 0
      %p81 = por %p79, %p80
      %s82 = ssub.s32 %s22, %s29
      %p83 = scmp.eq.s32.totalorder %s82, 0
      %s85 = sadd.s32 %s84, 1
      %s86 = scalar_select %p83, %s84, %s85
      %p89 = pneg %p83
      %p90 = scmp.eq.s32.totalorder %s22, 1
      %p91 = por %p89, %p90
      %p92 = scmp.ne.s32.totalorder %s84, %s87
      %p93 = scmp.eq.s32.totalorder %s22, 0
      %p94 = por %p92, %p93
      %p95 = scmp.ne.s32.totalorder %s84, %s87
      %p96 = scmp.eq.s32.totalorder %s27, 1
      %p97 = por %p95, %p96
      %p98 = scmp.ne.s32.totalorder %s87, %s88
      %p99 = scmp.eq.s32.totalorder %s27, 0
      %p100 = por %p98, %p99
      %p101 = scmp.ne.s32.totalorder %s87, %s88
      %p102 = scmp.eq.s32.totalorder %s28, 1
      %p103 = por %p101, %p102
      %p105 = scmp.ne.s32.totalorder %s88, %s104
      %p106 = scmp.eq.s32.totalorder %s28, 0
      %p107 = por %p105, %p106
      %s108 = ssub.s32 %s22, %s29
      %p109 = scmp.eq.s32.totalorder %s108, 0
      %s111 = sadd.s32 %s110, 1
      %s112 = scalar_select %p109, %s110, %s111
      %p115 = pneg %p109
      %p116 = scmp.eq.s32.totalorder %s22, 1
      %p117 = por %p115, %p116
      %p118 = scmp.ne.s32.totalorder %s110, %s113
      %p119 = scmp.eq.s32.totalorder %s22, 0
      %p120 = por %p118, %p119
      %p121 = scmp.ne.s32.totalorder %s110, %s113
      %p122 = scmp.eq.s32.totalorder %s27, 1
      %p123 = por %p121, %p122
      %p124 = scmp.ne.s32.totalorder %s113, %s114
      %p125 = scmp.eq.s32.totalorder %s27, 0
      %p126 = por %p124, %p125
      %p127 = scmp.ne.s32.totalorder %s113, %s114
      %p128 = scmp.eq.s32.totalorder %s28, 1
      %p129 = por %p127, %p128
      %p131 = scmp.ne.s32.totalorder %s114, %s130
      %p132 = scmp.eq.s32.totalorder %s28, 0
      %p133 = por %p131, %p132
      %p134 = scmp.le.s32.totalorder 1, %s22
      %p135 = scmp.lt.s32.totalorder %s22, 3
      %p136 = pnand %p134, %p135
      %p137 = pneg %p136
      // Predicated region
      $region9: #{tpu_custom_call.1} parent=5 // pred_check
        _
      $region10: #{tpu_custom_call.1} parent=5 // pred_check_branch
        %139 = sbr.rel (%p136) target = $region12
      $region11: #{tpu_custom_call.1} parent=5 // pred_region
        %s140 = ssub.s32 %s22, 1
      $region12: #{tpu_custom_call.1} parent=5 // pred_fallthru
        _
      %p141 = scmp.lt.s32.totalorder %s22, 2
      // Predicated region
      $region13: #{tpu_custom_call.1} parent=5 // pred_check
        %p142 = pneg %p141
      $region14: #{tpu_custom_call.1} parent=5 // pred_check_branch
        %144 = sbr.rel (%p142) target = $region16
      $region15: #{tpu_custom_call.1} parent=5 // pred_region
        // Predicated region
        $region17: #{tpu_custom_call.1} parent=15 // pred_check
          %p145 = pneg %p42
        $region18: #{tpu_custom_call.1} parent=15 // pred_check_branch
          %147 = sbr.rel (%p145) target = $region20
        $region19: #{tpu_custom_call.1} parent=15 // pred_region
          %s148 = sand.u32 %s32, 1
          %s149 = scalar_lea.sflag [#allocation3], %s148
          %s150 = sand.u32 %s32, 1
          %s151 = smul.addr %s150, 8
          %s152 = scalar_lea.vmem [#allocation2], %s151
          %154 = vsyncadd %s149, 0
          %s155 = smul.addr %s22, 8
          %s156 = scalar_lea.hbm %s0, %s155
          %s158 = sshll.u32 %s156, 4
          %s159 = int_to_ptr.hbm [resolvable:$true] %s158
          %s160 = sshll.u32 %s152, 4
          %s161 = int_to_ptr.vmem [resolvable:$true] %s160
          %163 = dma.hbm_to_vmem [thread:$0]  %s159, 128, %s161, %s149
        $region20: #{tpu_custom_call.1} parent=15 // pred_fallthru
          _
        // Predicated region
        $region21: #{tpu_custom_call.1} parent=15 // pred_check
          %p164 = pneg %p68
        $region22: #{tpu_custom_call.1} parent=15 // pred_check_branch
          %166 = sbr.rel (%p164) target = $region24
        $region23: #{tpu_custom_call.1} parent=15 // pred_region
          %s167 = sand.u32 %s58, 1
          %s168 = scalar_lea.sflag [#allocation6], %s167
          %s169 = sand.u32 %s58, 1
          %s170 = smul.addr %s169, 8
          %s171 = scalar_lea.vmem [#allocation5], %s170
          %173 = vsyncadd %s168, 0
          %s174 = smul.addr %s22, 8
          %s175 = scalar_lea.hbm %s1, %s174
          %s177 = sshll.u32 %s175, 4
          %s178 = int_to_ptr.hbm [resolvable:$true] %s177
          %s179 = sshll.u32 %s171, 4
          %s180 = int_to_ptr.vmem [resolvable:$true] %s179
          %182 = dma.hbm_to_vmem [thread:$0]  %s178, 128, %s180, %s168
        $region24: #{tpu_custom_call.1} parent=15 // pred_fallthru
          _
      $region16: #{tpu_custom_call.1} parent=5 // pred_fallthru
        _
      %p183 = scmp.le.s32.totalorder 1, %s22
      %p184 = scmp.lt.s32.totalorder %s22, 3
      %p185 = pnand %p183, %p184
      %p186 = pneg %p185
      // Predicated region
      $region25: #{tpu_custom_call.1} parent=5 // pred_check
        _
      $region26: #{tpu_custom_call.1} parent=5 // pred_check_branch
        %188 = sbr.rel (%p185) target = $region28
      $region27: #{tpu_custom_call.1} parent=5 // pred_region
        %s189 = ssub.s32 %s22, 1
        %s190 = sand.u32 %s35, 1
        %s191 = scalar_lea.sflag [#allocation3], %s190
        %s192 = sand.u32 %s35, 1
        %s193 = smul.addr %s192, 8
        %s194 = scalar_lea.vmem [#allocation2], %s193
        // Predicated region
        $region29: #{tpu_custom_call.1} parent=27 // pred_check
          %p195 = pneg %p48
        $region30: #{tpu_custom_call.1} parent=27 // pred_check_branch
          %197 = sbr.rel (%p195) target = $region32
        $region31: #{tpu_custom_call.1} parent=27 // pred_region
          %199 = dma.done %s191, 128
        $region32: #{tpu_custom_call.1} parent=27 // pred_fallthru
          _
        %s200 = sand.u32 %s61, 1
        %s201 = scalar_lea.sflag [#allocation6], %s200
        %s202 = sand.u32 %s61, 1
        %s203 = smul.addr %s202, 8
        %s204 = scalar_lea.vmem [#allocation5], %s203
        // Predicated region
        $region33: #{tpu_custom_call.1} parent=27 // pred_check
          %p205 = pneg %p74
        $region34: #{tpu_custom_call.1} parent=27 // pred_check_branch
          %207 = sbr.rel (%p205) target = $region36
        $region35: #{tpu_custom_call.1} parent=27 // pred_region
          %209 = dma.done %s201, 128
        $region36: #{tpu_custom_call.1} parent=27 // pred_fallthru
          _
        %s210 = sand.u32 %s35, 1
        %s211 = scalar_lea.sflag [#allocation3], %s210
        %s212 = sand.u32 %s35, 1
        %s213 = smul.addr %s212, 8
        %s214 = scalar_lea.vmem [#allocation2], %s213
        %p215 = pneg %p48
        %p216 = pneg %p45
        %s217 = sand.u32 %s61, 1
        %s218 = scalar_lea.sflag [#allocation6], %s217
        %s219 = sand.u32 %s61, 1
        %s220 = smul.addr %s219, 8
        %s221 = scalar_lea.vmem [#allocation5], %s220
        %p222 = pneg %p74
        %p223 = pneg %p71
        %p224 = pneg %p100
        %p225 = pneg %p97
        %s226 = sand.u32 %s87, 1
        %s227 = scalar_lea.sflag [#allocation4], %s226
        %s228 = sand.u32 %s87, 1
        %s229 = smul.addr %s228, 8
        %s230 = scalar_lea.vmem [#allocation7], %s229
        %p231 = pneg %p126
        %p232 = pneg %p123
        %s233 = sand.u32 %s113, 1
        %s234 = scalar_lea.sflag [#allocation9], %s233
        %s235 = sand.u32 %s113, 1
        %s236 = smul.addr %s235, 8
        %s237 = scalar_lea.vmem [#allocation8], %s236
        %v238 = vld [vmem:[%s194] sm:$0xff]
        %v239 = vld [vmem:[%s204] sm:$0xff]
        %v240 = vmul.f32 %v238, %v238
        %v241 = vmul.f32 %v239, %v239
        %v242 = vadd.f32 %v240, %v241
        %v243 = vrsqrt.pop %v242
        %v244 = vmul.f32 %v243, %v242
        %v245 = vmul.f32 %v244, %v243
        %v246 = vmul.f32 0.5, %v245
        %v247 = vsub.f32 1.5, %v246
        %v248 = vmul.f32 %v243, %v247
        %v249 = vmul.f32 %v242, %v248
        %vm250 = vcmp.eq.f32.partialorder %v242, inf
        %v251 = vsel %vm250, %v242, %v249
        %vm252 = vcmp.eq.f32.partialorder %v242, 0.0
        %v253 = vand.u32 %v242, 2147483648
        %v254 = vsel %vm252, %v253, %v251
        %v255 = vand.u32 2147483647, %v238
        %v256 = vand.u32 2147483647, %v239
        %v257 = vmin.f32 %v255, %v256
        %v258 = vmax.f32 %v255, %v256
        %v259 = vmul.f32 %v258, 0.41421357
        %vm260 = vcmp.gt.f32.partialorder %v257, %v259
        %v261 = vsub.f32 %v257, %v258
        %v262 = vsel %vm260, %v261, %v257
        %v263 = vadd.f32 %v257, %v258
        %v264 = vsel %vm260, %v263, %v258
        %vm265 = vcmp.eq.f32.partialorder %v264, 0.0
        %v266 = vsel %vm265, 1.0, %v264
        %v267 = vrcp.pop %v266
        %v268 = vmul.f32 %v266, %v267
        %v269 = vsub.f32 2.0, %v268
        %v270 = vmul.f32 %v267, %v269
        %v271 = vmul.f32 %v266, %v270
        %v272 = vsub.f32 2.0, %v271
        %v273 = vmul.f32 %v270, %v272
        %v274 = vmul.f32 %v262, %v273
        %v275 = vmul.f32 %v274, %v274
        %v276 = vmul.f32 %v275, 0.080537446
        %v277 = vsub.f32 %v276, 0.13877685
        %v278 = vmul.f32 %v277, %v275
        %v279 = vadd.f32 %v278, 0.19977711
        %v280 = vmul.f32 %v279, %v275
        %v281 = vsub.f32 %v280, 0.3333295
        %v282 = vmul.f32 %v281, %v275
        %v283 = vmul.f32 %v282, %v274
        %v284 = vadd.f32 %v283, %v274
        %v285 = vsel %vm260, 0.7853982, 0.0
        %v286 = vadd.f32 %v284, %v285
        %vm287 = vcmp.gt.f32.partialorder %v255, %v256
        %v288 = vsub.f32 1.5707964, %v286
        %v289 = vsel %vm287, %v288, %v286
        %vm290 = vcmp.lt.f32.partialorder %v239, 0.0
        %v291 = vsub.f32 3.1415927, %v289
        %v292 = vsel %vm290, %v291, %v289
        %vm293 = vcmp.lt.f32.partialorder %v238, 0.0
        %v294 = vsub.f32 0.0, %v292
        %v295 = vsel %vm293, %v294, %v292
        %v296 = vadd.f32 %v295, 3.1415927
        %vm297 = vcmp.gt.f32.partialorder %v254, 0.5
        %v298 = vmin.f32 %v254, 1.0
        %v299 = vsel %vm297, %v298, 0.0
        %300 = vst [vmem:[%s230] sm:$0xff] %v254
        %v301 = vmul.f32 %v296, %v299
        %302 = vst [vmem:[%s237] sm:$0xff] %v301
        %s303 = sand.u32 %s87, 1
        %s304 = scalar_lea.sflag [#allocation4], %s303
        %s305 = sand.u32 %s87, 1
        %s306 = smul.addr %s305, 8
        %s307 = scalar_lea.vmem [#allocation7], %s306
        %s308 = sand.u32 %s113, 1
        %s309 = scalar_lea.sflag [#allocation9], %s308
        %s310 = sand.u32 %s113, 1
        %s311 = smul.addr %s310, 8
        %s312 = scalar_lea.vmem [#allocation8], %s311
        // Predicated region
        $region37: #{tpu_custom_call.1} parent=27 // pred_check
          %p313 = pneg %p97
        $region38: #{tpu_custom_call.1} parent=27 // pred_check_branch
          %315 = sbr.rel (%p313) target = $region40
        $region39: #{tpu_custom_call.1} parent=27 // pred_region
          %317 = vsyncadd %s304, 0
          %s318 = smul.addr %s27, 8
          %s319 = scalar_lea.hbm %s2, %s318
          %s321 = sshll.u32 %s307, 4
          %s322 = int_to_ptr.vmem [resolvable:$true] %s321
          %s323 = sshll.u32 %s319, 4
          %s324 = int_to_ptr.hbm [resolvable:$true] %s323
          %326 = dma.vmem_to_hbm [thread:$0]  %s322, 128, %s324, %s304
        $region40: #{tpu_custom_call.1} parent=27 // pred_fallthru
          _
        // Predicated region
        $region41: #{tpu_custom_call.1} parent=27 // pred_check
          %p327 = pneg %p123
        $region42: #{tpu_custom_call.1} parent=27 // pred_check_branch
          %329 = sbr.rel (%p327) target = $region44
        $region43: #{tpu_custom_call.1} parent=27 // pred_region
          %331 = vsyncadd %s309, 0
          %s332 = smul.addr %s27, 8
          %s333 = scalar_lea.hbm %s3, %s332
          %s335 = sshll.u32 %s312, 4
          %s336 = int_to_ptr.vmem [resolvable:$true] %s335
          %s337 = sshll.u32 %s333, 4
          %s338 = int_to_ptr.hbm [resolvable:$true] %s337
          %340 = dma.vmem_to_hbm [thread:$0]  %s336, 128, %s338, %s309
        $region44: #{tpu_custom_call.1} parent=27 // pred_fallthru
          _
      $region28: #{tpu_custom_call.1} parent=5 // pred_fallthru
        _
      %p341 = scmp.le.s32.totalorder 2, %s22
      // Predicated region
      $region45: #{tpu_custom_call.1} parent=5 // pred_check
        %p342 = pneg %p341
      $region46: #{tpu_custom_call.1} parent=5 // pred_check_branch
        %344 = sbr.rel (%p342) target = $region48
      $region47: #{tpu_custom_call.1} parent=5 // pred_region
        %s345 = ssub.s32 %s22, 2
        // Predicated region
        $region49: #{tpu_custom_call.1} parent=47 // pred_check
          %p346 = pneg %p103
        $region50: #{tpu_custom_call.1} parent=47 // pred_check_branch
          %348 = sbr.rel (%p346) target = $region52
        $region51: #{tpu_custom_call.1} parent=47 // pred_region
          %s349 = sand.u32 %s88, 1
          %s350 = scalar_lea.sflag [#allocation4], %s349
          %s351 = sand.u32 %s88, 1
          %s352 = smul.addr %s351, 8
          %s353 = scalar_lea.vmem [#allocation7], %s352
          %355 = dma.done %s350, 128
        $region52: #{tpu_custom_call.1} parent=47 // pred_fallthru
          _
        // Predicated region
        $region53: #{tpu_custom_call.1} parent=47 // pred_check
          %p356 = pneg %p129
        $region54: #{tpu_custom_call.1} parent=47 // pred_check_branch
          %358 = sbr.rel (%p356) target = $region56
        $region55: #{tpu_custom_call.1} parent=47 // pred_region
          %s359 = sand.u32 %s114, 1
          %s360 = scalar_lea.sflag [#allocation9], %s359
          %s361 = sand.u32 %s114, 1
          %s362 = smul.addr %s361, 8
          %s363 = scalar_lea.vmem [#allocation8], %s362
          %365 = dma.done %s360, 128
        $region56: #{tpu_custom_call.1} parent=47 // pred_fallthru
          _
      $region48: #{tpu_custom_call.1} parent=5 // pred_fallthru
        _
    $region6: #{tpu_custom_call.1} parent=1 // loop_footer
      %s26 = sadd.s32 1, %s22
    $region7: #{tpu_custom_call.1} parent=1 // loop_footer_branch
      %21 = sbr.rel target = $region3
    $region8: #{tpu_custom_call.1} parent=1 // loop_exit
      _
    %366 = vsyncpa [#allocation3], 1
    %s367 = scalar_lea.sflag [#allocation3], 1
    %368 = vsyncpa %s367, 1
    %369 = vsyncpa [#allocation6], 1
    %s370 = scalar_lea.sflag [#allocation6], 1
    %371 = vsyncpa %s370, 1
    %372 = vsyncpa [#allocation4], 1
    %s373 = scalar_lea.sflag [#allocation4], 1
    %374 = vsyncpa %s373, 1
    %375 = vsyncpa [#allocation9], 1
    %s376 = scalar_lea.sflag [#allocation9], 1
    %377 = vsyncpa %s376, 1

</llo_original>
